<compile_context>
chip_gen: v6e
topology: v6e:2x2x1
jax: 0.10.0
libtpu: 0.0.40
codegen_flags: <defaults>
</compile_context>

<pallas_src>
import jax
import jax.numpy as jnp
from jax import lax
from jax.experimental import pallas as pl
from jax.experimental.pallas import tpu as pltpu


def mlp_kernel(x_ref, w1_ref, b1_ref, w2_ref, b2_ref, o_ref):
    # x:  [TB, in]            (VMEM, tiled over batch)
    # w1: [hidden, in]        (VMEM, resident)   b1: [1, hidden]
    # w2: [out, hidden]       (VMEM, resident)   b2: [1, out]
    x = x_ref[...]

    # Layer 1: contract the last dim of both operands (PyTorch weight layout,
    # keeps both tensors lane-dense, no wrapper-side transpose needed).
    h = lax.dot_general(
        x, w1_ref[...],
        dimension_numbers=(((1,), (1,)), ((), ())),
        preferred_element_type=jnp.float32,
    )                                            # [TB, hidden]
    h = jnp.maximum(h + b1_ref[...], 0.0)        # bias + ReLU on the VPU

    # Layer 2: again contract last dims (h [TB, hidden] . w2 [out, hidden]).
    y = lax.dot_general(
        h.astype(w2_ref.dtype), w2_ref[...],
        dimension_numbers=(((1,), (1,)), ((), ())),
        preferred_element_type=jnp.float32,
    )                                            # [TB, out]
    o_ref[...] = (y + b2_ref[...]).astype(o_ref.dtype)


def test_module_forward(x, w1, b1, w2, b2, *, tb=1024):
    """x: [B, input_size]; w1: [hidden, input_size]; b1: [hidden];
       w2: [output_size, hidden]; b2: [output_size]."""
    B, in_size = x.shape
    hidden = w1.shape[0]
    out_size = w2.shape[0]

    # Biases as 2-D rows for TPU-friendly (sublane, lane) layout.
    b1_2d = b1.reshape(1, hidden)
    b2_2d = b2.reshape(1, out_size)

    # Batch tile: large enough to amortize per-step overhead (~600 cycles),
    # tiny vs. VMEM (2 * TB * (in+out) * 4 bytes double-buffered).
    TB = min(tb, B)
    grid_b = pl.cdiv(B, TB)
    B_pad = grid_b * TB
    x_pad = x if B_pad == B else jnp.pad(x, ((0, B_pad - B), (0, 0)))

    itemsize = jnp.dtype(x.dtype).itemsize
    flops = 2 * B_pad * (in_size * hidden + hidden * out_size)
    bytes_accessed = itemsize * (
        x_pad.size + w1.size + b1.size + w2.size + b2.size + B_pad * out_size
    )
    cost = pl.CostEstimate(
        flops=flops, transcendentals=0, bytes_accessed=bytes_accessed
    )

    y_pad = pl.pallas_call(
        mlp_kernel,
        out_shape=jax.ShapeDtypeStruct((B_pad, out_size), x.dtype),
        grid=(grid_b,),
        in_specs=[
            # x: tiled over batch.
            pl.BlockSpec((TB, in_size), lambda i: (i, 0)),
            # Weights / biases: full arrays, resident across grid steps.
            pl.BlockSpec((hidden, in_size), lambda i: (0, 0)),
            pl.BlockSpec((1, hidden), lambda i: (0, 0)),
            pl.BlockSpec((out_size, hidden), lambda i: (0, 0)),
            pl.BlockSpec((1, out_size), lambda i: (0, 0)),
        ],
        out_specs=pl.BlockSpec((TB, out_size), lambda i: (i, 0)),
        compiler_params=pltpu.CompilerParams(
            dimension_semantics=("parallel",),
        ),
        cost_estimate=cost,
    )(x_pad, w1, b1_2d, w2, b2_2d)

    return y_pad if B_pad == B else y_pad[:B]


def _reference(x, w1, b1, w2, b2):
    return jnp.maximum(x @ w1.T + b1, 0.0) @ w2.T + b2


if __name__ == "__main__":
    # Shapes implied by the module: Linear(input_size, 5), Linear(5, output_size)
    batch = 8
    input_size = 32
    internal_size = 5
    output_size = 16

    key = jax.random.PRNGKey(0)
    kx, kw1, kb1, kw2, kb2, kx2 = jax.random.split(key, 6)

    x = jax.random.normal(kx, (batch, input_size), dtype=jnp.float32)

    # Deterministic parameter init (PyTorch-Linear-like uniform bounds).
    bound1 = 1.0 / (input_size ** 0.5)
    w1 = jax.random.uniform(kw1, (internal_size, input_size),
                            minval=-bound1, maxval=bound1, dtype=jnp.float32)
    b1 = jax.random.uniform(kb1, (internal_size,),
                            minval=-bound1, maxval=bound1, dtype=jnp.float32)
    bound2 = 1.0 / (internal_size ** 0.5)
    w2 = jax.random.uniform(kw2, (output_size, internal_size),
                            minval=-bound2, maxval=bound2, dtype=jnp.float32)
    b2 = jax.random.uniform(kb2, (output_size,),
                            minval=-bound2, maxval=bound2, dtype=jnp.float32)

    # 1) Toy batch (single grid step, TB == B).
    y = test_module_forward(x, w1, b1, w2, b2)
    jax.block_until_ready(y)
    ref = _reference(x, w1, b1, w2, b2)
    assert y.shape == (batch, output_size)
    assert jnp.allclose(y, ref, atol=1e-5, rtol=1e-5)

    # 2) Larger, ragged batch: exercises the batch grid (resident weights),
    #    parallel dimension semantics, and the pad-then-slice path.
    big_batch = 300
    x_big = jax.random.normal(kx2, (big_batch, input_size), dtype=jnp.float32)
    y_big = test_module_forward(x_big, w1, b1, w2, b2, tb=128)
    jax.block_until_ready(y_big)
    ref_big = _reference(x_big, w1, b1, w2, b2)
    assert y_big.shape == (big_batch, output_size)
    assert jnp.allclose(y_big, ref_big, atol=1e-5, rtol=1e-5)

    print("KERNEL_OK")
</pallas_src>

<mosaic_0001>
module attributes {stable_mosaic.version = 11 : i64} {
  func.func @mlp_kernel(%arg0: i32, %arg1: memref<8x32xf32, #tpu.memory_space<vmem>>, %arg2: memref<5x32xf32, #tpu.memory_space<vmem>>, %arg3: memref<1x5xf32, #tpu.memory_space<vmem>>, %arg4: memref<16x5xf32, #tpu.memory_space<vmem>>, %arg5: memref<1x16xf32, #tpu.memory_space<vmem>>, %arg6: memref<8x16xf32, #tpu.memory_space<vmem>>) attributes {dimension_semantics = [#tpu.dimension_semantics<parallel>], iteration_bounds = array<i64: 1>, scalar_prefetch = 0 : i64, scratch_operands = 0 : i64, tpu.core_type = #tpu.core_type<tc>, window_params = [{transform_indices = @transform_0, window_bounds = array<i64: 8, 32>}, {pipeline_mode = #tpu.pipeline_mode<synchronous>, transform_indices = @transform_1, window_bounds = array<i64: 5, 32>}, {pipeline_mode = #tpu.pipeline_mode<synchronous>, transform_indices = @transform_2, window_bounds = array<i64: 1, 5>}, {pipeline_mode = #tpu.pipeline_mode<synchronous>, transform_indices = @transform_3, window_bounds = array<i64: 16, 5>}, {pipeline_mode = #tpu.pipeline_mode<synchronous>, transform_indices = @transform_4, window_bounds = array<i64: 1, 16>}, {transform_indices = @transform_5, window_bounds = array<i64: 8, 16>}]} {
    %c0 = arith.constant 0 : index
    %c0_0 = arith.constant 0 : index
    %0 = vector.load %arg1[%c0, %c0_0] : memref<8x32xf32, #tpu.memory_space<vmem>>, vector<8x32xf32>
    %c0_1 = arith.constant 0 : index
    %c0_2 = arith.constant 0 : index
    %1 = vector.load %arg2[%c0_1, %c0_2] : memref<5x32xf32, #tpu.memory_space<vmem>>, vector<5x32xf32>
    %cst = arith.constant dense<0.000000e+00> : vector<8x5xf32>
    %2 = tpu.matmul %0, %1, %cst {dimension_numbers = #tpu.dot_dimension_numbers<[1], [1], [0], [0], [0, 0, 1, 0], [], []>} : vector<8x32xf32>, vector<5x32xf32>, vector<8x5xf32> -> vector<8x5xf32>
    %c0_3 = arith.constant 0 : index
    %c0_4 = arith.constant 0 : index
    %3 = vector.load %arg3[%c0_3, %c0_4] : memref<1x5xf32, #tpu.memory_space<vmem>>, vector<1x5xf32>
    %4 = vector.broadcast %3 : vector<1x5xf32> to vector<8x5xf32>
    %5 = arith.addf %2, %4 : vector<8x5xf32>
    %cst_5 = arith.constant 0.000000e+00 : f32
    %6 = vector.broadcast %cst_5 : f32 to vector<8x5xf32>
    %7 = arith.maximumf %5, %6 : vector<8x5xf32>
    %c0_6 = arith.constant 0 : index
    %c0_7 = arith.constant 0 : index
    %8 = vector.load %arg4[%c0_6, %c0_7] : memref<16x5xf32, #tpu.memory_space<vmem>>, vector<16x5xf32>
    %cst_8 = arith.constant dense<0.000000e+00> : vector<8x16xf32>
    %9 = tpu.matmul %7, %8, %cst_8 {dimension_numbers = #tpu.dot_dimension_numbers<[1], [1], [0], [0], [0, 0, 1, 0], [], []>} : vector<8x5xf32>, vector<16x5xf32>, vector<8x16xf32> -> vector<8x16xf32>
    %c0_9 = arith.constant 0 : index
    %c0_10 = arith.constant 0 : index
    %10 = vector.load %arg5[%c0_9, %c0_10] : memref<1x16xf32, #tpu.memory_space<vmem>>, vector<1x16xf32>
    %11 = vector.broadcast %10 : vector<1x16xf32> to vector<8x16xf32>
    %12 = arith.addf %9, %11 : vector<8x16xf32>
    %c0_11 = arith.constant 0 : index
    %c0_12 = arith.constant 0 : index
    %13 = vector.load %arg6[%c0_11, %c0_12] : memref<8x16xf32, #tpu.memory_space<vmem>>, vector<8x16xf32>
    tpu.vector_store %arg6[%c0_11, %c0_12], %12 {strides = array<i32>} : memref<8x16xf32, #tpu.memory_space<vmem>>, vector<8x16xf32>,
    return
  }
  func.func @transform_0(%arg0: i32) -> (i32, i32) {
    %c0_i32 = arith.constant 0 : i32
    %c0_i32_0 = arith.constant 0 : i32
    return %arg0, %c0_i32 : i32, i32
  }
  func.func @transform_1(%arg0: i32) -> (i32, i32) {
    %c0_i32 = arith.constant 0 : i32
    %c0_i32_0 = arith.constant 0 : i32
    %c0_i32_1 = arith.constant 0 : i32
    return %c0_i32, %c0_i32_0 : i32, i32
  }
  func.func @transform_2(%arg0: i32) -> (i32, i32) {
    %c0_i32 = arith.constant 0 : i32
    %c0_i32_0 = arith.constant 0 : i32
    %c0_i32_1 = arith.constant 0 : i32
    return %c0_i32, %c0_i32_0 : i32, i32
  }
  func.func @transform_3(%arg0: i32) -> (i32, i32) {
    %c0_i32 = arith.constant 0 : i32
    %c0_i32_0 = arith.constant 0 : i32
    %c0_i32_1 = arith.constant 0 : i32
    return %c0_i32, %c0_i32_0 : i32, i32
  }
  func.func @transform_4(%arg0: i32) -> (i32, i32) {
    %c0_i32 = arith.constant 0 : i32
    %c0_i32_0 = arith.constant 0 : i32
    %c0_i32_1 = arith.constant 0 : i32
    return %c0_i32, %c0_i32_0 : i32, i32
  }
  func.func @transform_5(%arg0: i32) -> (i32, i32) {
    %c0_i32 = arith.constant 0 : i32
    %c0_i32_0 = arith.constant 0 : i32
    return %arg0, %c0_i32 : i32, i32
  }
}

</mosaic_0001>

<llo_original>
// kernel: tpu_custom_call.1
$region0: #{tpu_custom_call.1}
  #allocation0 [shape = 'u32[]', space=smem, size = 0x4, offset = 0x4, fixed_abs, tag = 'smem constant byte address 0x4 - core index']
  #allocation1 [shape = 'u32[144,128]{1,0:T(1,128)}', space=vmem, size = 0x12000, scoped, tag = 'internal scratch']
  %s0 = inlined_call_operand.vmem [shape: f32[8,32], index: 0, kind: input, shape index: {}]
  %s1 = inlined_call_operand.vmem [shape: f32[5,32], index: 1, kind: input, shape index: {}]
  %s2 = inlined_call_operand.vmem [shape: f32[1,5], index: 2, kind: input, shape index: {}]
  %s3 = inlined_call_operand.vmem [shape: f32[16,5], index: 3, kind: input, shape index: {}]
  %s4 = inlined_call_operand.vmem [shape: f32[1,16], index: 4, kind: input, shape index: {}]
  %s5 = inlined_call_operand.hbm [shape: f32[8,16], index: 5, kind: output, shape index: {}]
  %s6 = sld [smem:[#allocation0]]
  $region30: #{tpu_custom_call.1} parent=0
    _
  %s8 = ssub.s32 1, %s6
  %s9 = scalar_select 0, %s8, %s6
  $region1: #{tpu_custom_call.1} parent=0
    #allocation2 [shape = 'u8[4096]{0}', space=vmem, size = 0x1000, scoped, tag = 'output window, operand 0, single buffered']
    #allocation3 [shape = 's32[1]{0}', space=sflag, size = 0x4, scoped, tag = 'scoped memory for tpu_custom_call.1']
    %10 = vsyncpa [#allocation3], 0
    // Predicated region
    $region2: #{tpu_custom_call.1} parent=1 // pred_check
      _
    $region3: #{tpu_custom_call.1} parent=1 // pred_check_branch
      %12 = sbr.rel (0) target = $region5
    $region4: #{tpu_custom_call.1} parent=1 // pred_region
      _
    $region5: #{tpu_custom_call.1} parent=1 // pred_fallthru
      _
    // Predicated region
    $region6: #{tpu_custom_call.1} parent=1 // pred_check
      _
    $region7: #{tpu_custom_call.1} parent=1 // pred_check_branch
      %14 = sbr.rel (0) target = $region9
    $region8: #{tpu_custom_call.1} parent=1 // pred_region
      _
    $region9: #{tpu_custom_call.1} parent=1 // pred_fallthru
      _
    // Predicated region
    $region10: #{tpu_custom_call.1} parent=1 // pred_check
      _
    $region11: #{tpu_custom_call.1} parent=1 // pred_check_branch
      %16 = sbr.rel (0) target = $region13
    $region12: #{tpu_custom_call.1} parent=1 // pred_region
      _
    $region13: #{tpu_custom_call.1} parent=1 // pred_fallthru
      _
    // Predicated region
    $region14: #{tpu_custom_call.1} parent=1 // pred_check
      _
    $region15: #{tpu_custom_call.1} parent=1 // pred_check_branch
      %18 = sbr.rel (0) target = $region17
    $region16: #{tpu_custom_call.1} parent=1 // pred_region
      _
    $region17: #{tpu_custom_call.1} parent=1 // pred_fallthru
      _
    // Predicated region
    $region18: #{tpu_custom_call.1} parent=1 // pred_check
      _
    $region19: #{tpu_custom_call.1} parent=1 // pred_check_branch
      %20 = sbr.rel (0) target = $region21
    $region20: #{tpu_custom_call.1} parent=1 // pred_region
      _
    $region21: #{tpu_custom_call.1} parent=1 // pred_fallthru
      _
    %v21 = vld [vmem:[%s0] sm:$0xff]
    %v22 = vld [vmem:[%s1] sm:$0x1f]
    %v23 = vld [vmem:[%s2] sm:$0x1]
    %v25 = vlaneseq
    %v26 = vshrl.u32 %v25, 7
    %v27 = vsub.s32 0, %v26
    %v28 = vrot.slane %v23, %v27
    %vm30 = vcmask 261120
    %v32 = vsel %vm30, %v21, 0
    %v35 = vsel %vm30, %v22, 0
    %37 = vmatprep.subr.mxu0 0.0
    %38 = vmatpush1.xpose.msra.mxu0 0.0
    %39 = vmatprep.subr.mxu0 0.0
    %40 = vmatpush1.xpose.msra.mxu0 0.0
    %41 = vmatprep.subr.mxu0 0.0
    %42 = vmatpush1.xpose.msra.mxu0 0.0
    %43 = vmatprep.subr.mxu0 0.0
    %44 = vmatpush1.xpose.msra.mxu0 0.0
    %45 = vmatprep.subr.mxu0 0.0
    %46 = vmatpush1.xpose.msra.mxu0 0.0
    %47 = vmatprep.subr.mxu0 0.0
    %48 = vmatpush1.xpose.msra.mxu0 0.0
    %49 = vmatprep.subr.mxu0 0.0
    %50 = vmatpush1.xpose.msra.mxu0 0.0
    %51 = vmatprep.subr.mxu0 0.0
    %52 = vmatpush1.xpose.msra.mxu0 0.0
    %53 = vmatprep.subr.mxu0 0.0
    %54 = vmatpush1.xpose.msra.mxu0 0.0
    %55 = vmatprep.subr.mxu0 0.0
    %56 = vmatpush1.xpose.msra.mxu0 0.0
    %57 = vmatprep.subr.mxu0 0.0
    %58 = vmatpush1.xpose.msra.mxu0 0.0
    %59 = vmatprep.subr.mxu0 0.0
    %60 = vmatpush1.xpose.msra.mxu0 0.0
    %61 = vmatprep.subr.mxu0 0.0
    %62 = vmatpush1.xpose.msra.mxu0 0.0
    %63 = vmatprep.subr.mxu0 0.0
    %64 = vmatpush1.xpose.msra.mxu0 0.0
    %65 = vmatprep.subr.mxu0 0.0
    %66 = vmatpush1.xpose.msra.mxu0 0.0
    %67 = vmatprep.subr.mxu0 0.0
    %68 = vmatpush1.xpose.msra.mxu0 %v35
    %69 = vmatprep.subr.mxu0 0.0
    %70 = vmatpush2.xpose.msra.mxu0 0.0
    %71 = vmatprep.subr.mxu0 0.0
    %72 = vmatpush2.xpose.msra.mxu0 0.0
    %73 = vmatprep.subr.mxu0 0.0
    %74 = vmatpush2.xpose.msra.mxu0 0.0
    %75 = vmatprep.subr.mxu0 0.0
    %76 = vmatpush2.xpose.msra.mxu0 0.0
    %77 = vmatprep.subr.mxu0 0.0
    %78 = vmatpush2.xpose.msra.mxu0 0.0
    %79 = vmatprep.subr.mxu0 0.0
    %80 = vmatpush2.xpose.msra.mxu0 0.0
    %81 = vmatprep.subr.mxu0 0.0
    %82 = vmatpush2.xpose.msra.mxu0 0.0
    %83 = vmatprep.subr.mxu0 0.0
    %84 = vmatpush2.xpose.msra.mxu0 0.0
    %85 = vmatprep.subr.mxu0 0.0
    %86 = vmatpush2.xpose.msra.mxu0 0.0
    %87 = vmatprep.subr.mxu0 0.0
    %88 = vmatpush2.xpose.msra.mxu0 0.0
    %89 = vmatprep.subr.mxu0 0.0
    %90 = vmatpush2.xpose.msra.mxu0 0.0
    %91 = vmatprep.subr.mxu0 0.0
    %92 = vmatpush2.xpose.msra.mxu0 0.0
    %93 = vmatprep.subr.mxu0 0.0
    %94 = vmatpush2.xpose.msra.mxu0 0.0
    %95 = vmatprep.subr.mxu0 0.0
    %96 = vmatpush2.xpose.msra.mxu0 0.0
    %97 = vmatprep.subr.mxu0 0.0
    %98 = vmatpush2.xpose.msra.mxu0 0.0
    %99 = vmatprep.subr.mxu0 0.0
    %100 = vmatpush2.xpose.msra.mxu0 0.0
    %101 = vmatprep.mubr.f32.mxu0 0.0
    %102 = vmatmul.mubr.f32.gmra.mxu0 %v32
    %v103 = vpop.f32.mrf.mxu0
    %v104 = vadd.f32 %v28, %v103
    %v105 = vpop.f32.mrf.mxu0
    %106 = vdwg.mxu0
    %v107 = vmax.f32 %v104, 0.0
    %v108 = vld [vmem:[%s3] sm:$0xff]
    %v109 = vld [vmem:[%s3 + $0x8] sm:$0xff]
    %v110 = vld [vmem:[%s4] sm:$0x1]
    %v112 = vlaneseq
    %v113 = vshrl.u32 %v112, 7
    %v114 = vsub.s32 0, %v113
    %v115 = vrot.slane %v110, %v114
    %vm117 = vcmask 39936
    %v119 = vsel %vm117, %v107, 0
    %v122 = vsel %vm117, %v108, 0
    %v125 = vsel %vm117, %v109, 0
    %127 = vmatprep.subr.mxu0 0.0
    %128 = vmatpush1.xpose.msra.mxu0 0.0
    %129 = vmatprep.subr.mxu0 0.0
    %130 = vmatpush1.xpose.msra.mxu0 0.0
    %131 = vmatprep.subr.mxu0 0.0
    %132 = vmatpush1.xpose.msra.mxu0 0.0
    %133 = vmatprep.subr.mxu0 0.0
    %134 = vmatpush1.xpose.msra.mxu0 0.0
    %135 = vmatprep.subr.mxu0 0.0
    %136 = vmatpush1.xpose.msra.mxu0 0.0
    %137 = vmatprep.subr.mxu0 0.0
    %138 = vmatpush1.xpose.msra.mxu0 0.0
    %139 = vmatprep.subr.mxu0 0.0
    %140 = vmatpush1.xpose.msra.mxu0 0.0
    %141 = vmatprep.subr.mxu0 0.0
    %142 = vmatpush1.xpose.msra.mxu0 0.0
    %143 = vmatprep.subr.mxu0 0.0
    %144 = vmatpush1.xpose.msra.mxu0 0.0
    %145 = vmatprep.subr.mxu0 0.0
    %146 = vmatpush1.xpose.msra.mxu0 0.0
    %147 = vmatprep.subr.mxu0 0.0
    %148 = vmatpush1.xpose.msra.mxu0 0.0
    %149 = vmatprep.subr.mxu0 0.0
    %150 = vmatpush1.xpose.msra.mxu0 0.0
    %151 = vmatprep.subr.mxu0 0.0
    %152 = vmatpush1.xpose.msra.mxu0 0.0
    %153 = vmatprep.subr.mxu0 0.0
    %154 = vmatpush1.xpose.msra.mxu0 0.0
    %155 = vmatprep.subr.mxu0 0.0
    %156 = vmatpush1.xpose.msra.mxu0 %v125
    %157 = vmatprep.subr.mxu0 0.0
    %158 = vmatpush1.xpose.msra.mxu0 %v122
    %159 = vmatprep.subr.mxu0 0.0
    %160 = vmatpush2.xpose.msra.mxu0 0.0
    %161 = vmatprep.subr.mxu0 0.0
    %162 = vmatpush2.xpose.msra.mxu0 0.0
    %163 = vmatprep.subr.mxu0 0.0
    %164 = vmatpush2.xpose.msra.mxu0 0.0
    %165 = vmatprep.subr.mxu0 0.0
    %166 = vmatpush2.xpose.msra.mxu0 0.0
    %167 = vmatprep.subr.mxu0 0.0
    %168 = vmatpush2.xpose.msra.mxu0 0.0
    %169 = vmatprep.subr.mxu0 0.0
    %170 = vmatpush2.xpose.msra.mxu0 0.0
    %171 = vmatprep.subr.mxu0 0.0
    %172 = vmatpush2.xpose.msra.mxu0 0.0
    %173 = vmatprep.subr.mxu0 0.0
    %174 = vmatpush2.xpose.msra.mxu0 0.0
    %175 = vmatprep.subr.mxu0 0.0
    %176 = vmatpush2.xpose.msra.mxu0 0.0
    %177 = vmatprep.subr.mxu0 0.0
    %178 = vmatpush2.xpose.msra.mxu0 0.0
    %179 = vmatprep.subr.mxu0 0.0
    %180 = vmatpush2.xpose.msra.mxu0 0.0
    %181 = vmatprep.subr.mxu0 0.0
    %182 = vmatpush2.xpose.msra.mxu0 0.0
    %183 = vmatprep.subr.mxu0 0.0
    %184 = vmatpush2.xpose.msra.mxu0 0.0
    %185 = vmatprep.subr.mxu0 0.0
    %186 = vmatpush2.xpose.msra.mxu0 0.0
    %187 = vmatprep.subr.mxu0 0.0
    %188 = vmatpush2.xpose.msra.mxu0 0.0
    %189 = vmatprep.subr.mxu0 0.0
    %190 = vmatpush2.xpose.msra.mxu0 0.0
    %191 = vmatprep.mubr.f32.mxu0 0.0
    %192 = vmatmul.mubr.f32.gmra.mxu0 %v119
    %v193 = vpop.f32.mrf.mxu0
    %v194 = vadd.f32 %v115, %v193
    %v195 = vpop.f32.mrf.mxu0
    %196 = vdwg.mxu0
    %vm197 = vcmask 130048
    %198 = vst.msk [vmem:[#allocation2] sm:$0xff] %vm197, %v194
    // Predicated region
    $region22: #{tpu_custom_call.1} parent=1 // pred_check
      _
    $region23: #{tpu_custom_call.1} parent=1 // pred_check_branch
      %200 = sbr.rel (0) target = $region25
    $region24: #{tpu_custom_call.1} parent=1 // pred_region
      %s202 = ssub.s32 128, 128
      %203 = vsyncadd [#allocation3], %s202
      %s205 = sshll.u32 [#allocation2], 4
      %s206 = int_to_ptr.vmem [resolvable:$true] %s205
      %208 = dma.vmem_to_hbm [thread:$0]  %s206, 128, %s5, [#allocation3]
    $region25: #{tpu_custom_call.1} parent=1 // pred_fallthru
      _
    // Predicated region
    $region26: #{tpu_custom_call.1} parent=1 // pred_check
      _
    $region27: #{tpu_custom_call.1} parent=1 // pred_check_branch
      %210 = sbr.rel (0) target = $region29
    $region28: #{tpu_custom_call.1} parent=1 // pred_region
      %211 = dma.done [#allocation3], 128
    $region29: #{tpu_custom_call.1} parent=1 // pred_fallthru
      _
    %212 = vsyncpa [#allocation3], 1

</llo_original>
